<compile_context>
chip_gen: v7x
topology: tpu7x:2x2x1
jax: 0.10.0
libtpu: 0.0.40
codegen_flags: <defaults>
</compile_context>

<pallas_src>
import jax
import jax.numpy as jnp
from jax.experimental import pallas as pl
from jax.experimental.pallas import tpu as pltpu


# ----------------------------- tiling heuristics -----------------------------

_MIN_GRID_STEPS = 4            # enough steps for pipelining + both v7x TensorCores
_TARGET_STEP_BYTES = 4 << 20   # per-step DMA (x + out) large enough to hide step overhead
_MAX_TB = 16                   # bound the static per-step batch unroll


def _divisors(n):
    ds = set()
    i = 1
    while i * i <= n:
        if n % i == 0:
            ds.add(i)
            ds.add(n // i)
        i += 1
    return sorted(ds)


def _vmem_budget_bytes():
    """Double-buffered working-set budget, per TPU generation."""
    try:
        kind = jax.devices()[0].device_kind.lower()
    except Exception:  # pragma: no cover - be robust if backend query fails
        kind = ""
    if "v7" in kind:
        return 20 << 20   # v7x: 64 MiB physical VMEM (32 MiB scoped default)
    return 40 << 20       # v5e / v6e: 128 MiB physical VMEM


def _working_set_bytes(tb, tm, c_in, c_out, itemsize):
    # double-buffered x & out blocks + double-buffered weight tile
    return 2 * tb * (c_in + c_out) * tm * itemsize + 2 * c_out * c_in * itemsize


def _choose_tiles(B, c_in, c_out, M, itemsize, budget):
    """Pick (TB, TM): batch- and lane-tile sizes, VMEM-budget driven."""
    # Lane-tile candidates: multiples of 128 dividing M (descending). If M is not
    # a multiple of 128 we fall back to a single full-extent lane block.
    if M % 128 == 0:
        tm_cands = [128 * d for d in sorted(_divisors(M // 128), reverse=True)]
    else:
        tm_cands = [M]

    # Largest TM that fits the budget (with TB = 1).
    fitting = [t for t in tm_cands if _working_set_bytes(1, t, c_in, c_out, itemsize) <= budget]
    tm = fitting[0] if fitting else tm_cands[-1]

    # Keep enough grid steps to feed the pipeline / both v7x TensorCores.
    while B * (M // tm) < _MIN_GRID_STEPS:
        smaller = [t for t in tm_cands if t < tm]
        if not smaller:
            break
        tm = smaller[0]

    # Fold several batches per grid step while the per-step DMA is still small.
    tb = 1

    def step_bytes(t):
        return t * (c_in + c_out) * tm * itemsize

    for d in _divisors(B):
        if d <= tb:
            continue
        if d > _MAX_TB:
            break
        if _working_set_bytes(d, tm, c_in, c_out, itemsize) > budget:
            break
        if step_bytes(tb) >= _TARGET_STEP_BYTES:
            break
        if (B // d) * (M // tm) < _MIN_GRID_STEPS and B * (M // tm) >= _MIN_GRID_STEPS:
            break
        tb = d

    return tb, tm


# --------------------------------- kernel -----------------------------------

def _vnlinear_kernel(w_ref, x_ref, o_ref):
    # w_ref: (C_out, C_in)   weight tile, same block at every grid point (fetched once)
    # x_ref: (TB, C_in, TM)  TB batches x TM lane-dense fused (3 * spatial) samples
    # o_ref: (TB, C_out, TM)
    w = w_ref[...]
    for b in range(x_ref.shape[0]):  # TB is a small static constant (<= _MAX_TB)
        o_ref[b] = jnp.dot(
            w, x_ref[b], preferred_element_type=jnp.float32
        ).astype(o_ref.dtype)


# -------------------------------- wrapper ------------------------------------

@jax.jit
def vn_linear(x, w):
    """VNLinear forward.

    x: [B, C_in, 3, *spatial] (PyTorch layout).  w: [C_out, C_in] (nn.Linear weight).
    Returns [B, C_out, 3, *spatial].
    """
    B, C_in, D, *spatial = x.shape
    assert D == 3, "VNLinear expects 3-vectors on axis 2"
    C_out, C_in_w = w.shape
    assert C_in_w == C_in

    # Bandwidth-bound kernel: keep data movement in the activation dtype.  The tiny
    # weight is cast to match so the MXU sees one input dtype (f32 accumulation).
    w = w.astype(x.dtype)

    N = 1
    for s in spatial:
        N *= s
    M = D * N  # contiguous collapse of (3, *spatial): free reshape, no transpose

    x_flat = x.reshape(B, C_in, M)

    itemsize = jnp.dtype(x.dtype).itemsize
    budget = _vmem_budget_bytes()
    tb, tm = _choose_tiles(B, C_in, C_out, M, itemsize, budget)
    grid = (B // tb, M // tm)

    working_set = _working_set_bytes(tb, tm, C_in, C_out, itemsize)
    vmem_limit = max(int(1.25 * working_set) + (2 << 20), 32 << 20)

    cost = pl.CostEstimate(
        flops=2 * B * C_out * C_in * M,
        bytes_accessed=(B * C_in * M + B * C_out * M + C_out * C_in) * itemsize,
        transcendentals=0,
    )

    out_flat = pl.pallas_call(
        _vnlinear_kernel,
        out_shape=jax.ShapeDtypeStruct((B, C_out, M), x.dtype),
        grid_spec=pltpu.PrefetchScalarGridSpec(
            num_scalar_prefetch=0,
            grid=grid,
            in_specs=[
                pl.BlockSpec((C_out, C_in), lambda b, m: (0, 0)),       # weight, resident
                pl.BlockSpec((tb, C_in, tm), lambda b, m: (b, 0, m)),   # x tile
            ],
            out_specs=pl.BlockSpec((tb, C_out, tm), lambda b, m: (b, 0, m)),
        ),
        compiler_params=pltpu.CompilerParams(
            dimension_semantics=("parallel", "parallel"),
            vmem_limit_bytes=vmem_limit,
        ),
        cost_estimate=cost,
    )(w, x_flat)

    return out_flat.reshape((B, C_out, D, *spatial))


def vn_linear_ref(x, w):
    """Pure-JAX reference mirroring the PyTorch forward."""
    # out[b, co, d, s...] = sum_ci w[co, ci] * x[b, ci, d, s...]
    return jnp.einsum("oc,bc...->bo...", w, x)


if __name__ == "__main__":
    key = jax.random.PRNGKey(0)
    k1, k2 = jax.random.split(key)

    B, C_in, C_out, N_samples = 2, 4, 8, 16
    x = jax.random.normal(k1, (B, C_in, 3, N_samples), dtype=jnp.float32)
    w = 0.1 * jax.random.normal(k2, (C_out, C_in), dtype=jnp.float32)

    out = vn_linear(x, w)
    jax.block_until_ready(out)

    ref = vn_linear_ref(x, w)
    assert out.shape == (B, C_out, 3, N_samples)
    assert jnp.allclose(out, ref, atol=1e-5, rtol=1e-5), "mismatch vs reference"

    print("KERNEL_OK")
</pallas_src>

<mosaic_0001>
module attributes {stable_mosaic.version = 11 : i64} {
  func.func @_vnlinear_kernel(%arg0: i32, %arg1: i32, %arg2: memref<8x4xf32, #tpu.memory_space<vmem>>, %arg3: memref<2x4x48xf32, #tpu.memory_space<vmem>>, %arg4: memref<2x8x48xf32, #tpu.memory_space<vmem>>) attributes {dimension_semantics = [#tpu.dimension_semantics<parallel>, #tpu.dimension_semantics<parallel>], iteration_bounds = array<i64: 1, 1>, scalar_prefetch = 0 : i64, scratch_operands = 0 : i64, tpu.core_type = #tpu.core_type<tc>, window_params = [{pipeline_mode = #tpu.pipeline_mode<synchronous>, transform_indices = @transform_0, window_bounds = array<i64: 8, 4>}, {transform_indices = @transform_1, window_bounds = array<i64: 2, 4, 48>}, {transform_indices = @transform_2, window_bounds = array<i64: 2, 8, 48>}]} {
    %c0 = arith.constant 0 : index
    %c0_0 = arith.constant 0 : index
    %0 = vector.load %arg2[%c0, %c0_0] : memref<8x4xf32, #tpu.memory_space<vmem>>, vector<8x4xf32>
    %c0_1 = arith.constant 0 : index
    %c0_2 = arith.constant 0 : index
    %c0_3 = arith.constant 0 : index
    %1 = vector.load %arg3[%c0_1, %c0_2, %c0_3] : memref<2x4x48xf32, #tpu.memory_space<vmem>>, vector<1x4x48xf32>
    %2 = vector.shape_cast %1 : vector<1x4x48xf32> to vector<4x48xf32>
    %cst = arith.constant dense<0.000000e+00> : vector<8x48xf32>
    %3 = tpu.matmul %0, %2, %cst {dimension_numbers = #tpu.dot_dimension_numbers<[1], [0], [0], [1], [0, 0, 1, 1], [], []>} : vector<8x4xf32>, vector<4x48xf32>, vector<8x48xf32> -> vector<8x48xf32>
    %c0_4 = arith.constant 0 : index
    %c0_5 = arith.constant 0 : index
    %c0_6 = arith.constant 0 : index
    %4 = vector.load %arg4[%c0_4, %c0_5, %c0_6] : memref<2x8x48xf32, #tpu.memory_space<vmem>>, vector<1x8x48xf32>
    %5 = vector.shape_cast %4 : vector<1x8x48xf32> to vector<8x48xf32>
    %6 = vector.shape_cast %3 : vector<8x48xf32> to vector<1x8x48xf32>
    tpu.vector_store %arg4[%c0_4, %c0_5, %c0_6], %6 {strides = array<i32>} : memref<2x8x48xf32, #tpu.memory_space<vmem>>, vector<1x8x48xf32>,
    %c1 = arith.constant 1 : index
    %c0_7 = arith.constant 0 : index
    %c0_8 = arith.constant 0 : index
    %7 = vector.load %arg3[%c1, %c0_7, %c0_8] : memref<2x4x48xf32, #tpu.memory_space<vmem>>, vector<1x4x48xf32>
    %8 = vector.shape_cast %7 : vector<1x4x48xf32> to vector<4x48xf32>
    %cst_9 = arith.constant dense<0.000000e+00> : vector<8x48xf32>
    %9 = tpu.matmul %0, %8, %cst_9 {dimension_numbers = #tpu.dot_dimension_numbers<[1], [0], [0], [1], [0, 0, 1, 1], [], []>} : vector<8x4xf32>, vector<4x48xf32>, vector<8x48xf32> -> vector<8x48xf32>
    %c1_10 = arith.constant 1 : index
    %c0_11 = arith.constant 0 : index
    %c0_12 = arith.constant 0 : index
    %10 = vector.load %arg4[%c1_10, %c0_11, %c0_12] : memref<2x8x48xf32, #tpu.memory_space<vmem>>, vector<1x8x48xf32>
    %11 = vector.shape_cast %10 : vector<1x8x48xf32> to vector<8x48xf32>
    %12 = vector.shape_cast %9 : vector<8x48xf32> to vector<1x8x48xf32>
    tpu.vector_store %arg4[%c1_10, %c0_11, %c0_12], %12 {strides = array<i32>} : memref<2x8x48xf32, #tpu.memory_space<vmem>>, vector<1x8x48xf32>,
    return
  }
  func.func @transform_0(%arg0: i32, %arg1: i32) -> (i32, i32) {
    %c0_i32 = arith.constant 0 : i32
    %c0_i32_0 = arith.constant 0 : i32
    %c0_i32_1 = arith.constant 0 : i32
    return %c0_i32, %c0_i32_0 : i32, i32
  }
  func.func @transform_1(%arg0: i32, %arg1: i32) -> (i32, i32, i32) {
    %c0_i32 = arith.constant 0 : i32
    %c0_i32_0 = arith.constant 0 : i32
    return %arg0, %c0_i32, %arg1 : i32, i32, i32
  }
  func.func @transform_2(%arg0: i32, %arg1: i32) -> (i32, i32, i32) {
    %c0_i32 = arith.constant 0 : i32
    %c0_i32_0 = arith.constant 0 : i32
    return %arg0, %c0_i32, %arg1 : i32, i32, i32
  }
}

</mosaic_0001>

<llo_original>
// kernel: vn_linear.1
$region0: #{vn_linear.1}
  #allocation0 [shape = 'u32[]', space=smem, size = 0x4, offset = 0x4, fixed_abs, tag = 'smem constant byte address 0x4 - core index']
  #allocation1 [shape = 'u32[144,128]{1,0:T(1,128)}', space=vmem, size = 0x12000, scoped, tag = 'internal scratch']
  %s0 = inlined_call_operand.vmem [shape: f32[8,4], index: 0, kind: input, shape index: {}]
  %s1 = inlined_call_operand.vmem [shape: f32[2,4,48], index: 1, kind: input, shape index: {}]
  %s2 = inlined_call_operand.vmem [shape: f32[2,8,48], index: 2, kind: output, shape index: {}]
  %s3 = sld [smem:[#allocation0]]
  $region18: #{vn_linear.1} parent=0
    _
  %s5 = ssub.s32 1, %s3
  %s6 = scalar_select 0, %s5, %s3
  // Predicated region
  $region2: #{vn_linear.1} parent=0 // pred_check
    _
  $region3: #{vn_linear.1} parent=0 // pred_check_branch
    %8 = sbr.rel (0) target = $region5
  $region4: #{vn_linear.1} parent=0 // pred_region
    _
  $region5: #{vn_linear.1} parent=0 // pred_fallthru
    _
  // Predicated region
  $region6: #{vn_linear.1} parent=0 // pred_check
    _
  $region7: #{vn_linear.1} parent=0 // pred_check_branch
    %10 = sbr.rel (0) target = $region9
  $region8: #{vn_linear.1} parent=0 // pred_region
    _
  $region9: #{vn_linear.1} parent=0 // pred_fallthru
    _
  %v11 = vld [vmem:[%s0] sm:$0xff]
  %v12 = vld [vmem:[%s1] sm:$0xf]
  %vm13 = vcmask 31744
  %v15 = vsel %vm13, %v11, 0
  %vm17 = vcmask 1043456
  %v19 = vsel %vm17, %v12, 0
  %21 = vmatprep.subr.mxu0 0.0
  %22 = vmatpush1.msra.mxu0 %v19
  %23 = vmatprep.subr.mxu0 0.0
  %24 = vmatpush1.msra.mxu0 0.0
  %25 = vmatprep.subr.mxu0 0.0
  %26 = vmatpush1.msra.mxu0 0.0
  %27 = vmatprep.subr.mxu0 0.0
  %28 = vmatpush1.msra.mxu0 0.0
  %29 = vmatprep.subr.mxu0 0.0
  %30 = vmatpush1.msra.mxu0 0.0
  %31 = vmatprep.subr.mxu0 0.0
  %32 = vmatpush1.msra.mxu0 0.0
  %33 = vmatprep.subr.mxu0 0.0
  %34 = vmatpush1.msra.mxu0 0.0
  %35 = vmatprep.subr.mxu0 0.0
  %36 = vmatpush1.msra.mxu0 0.0
  %37 = vmatprep.subr.mxu0 0.0
  %38 = vmatpush1.msra.mxu0 0.0
  %39 = vmatprep.subr.mxu0 0.0
  %40 = vmatpush1.msra.mxu0 0.0
  %41 = vmatprep.subr.mxu0 0.0
  %42 = vmatpush1.msra.mxu0 0.0
  %43 = vmatprep.subr.mxu0 0.0
  %44 = vmatpush1.msra.mxu0 0.0
  %45 = vmatprep.subr.mxu0 0.0
  %46 = vmatpush1.msra.mxu0 0.0
  %47 = vmatprep.subr.mxu0 0.0
  %48 = vmatpush1.msra.mxu0 0.0
  %49 = vmatprep.subr.mxu0 0.0
  %50 = vmatpush1.msra.mxu0 0.0
  %51 = vmatprep.subr.mxu0 0.0
  %52 = vmatpush1.msra.mxu0 0.0
  %53 = vmatprep.subr.mxu0 0.0
  %54 = vmatpush1.msra.mxu0 0.0
  %55 = vmatprep.subr.mxu0 0.0
  %56 = vmatpush1.msra.mxu0 0.0
  %57 = vmatprep.subr.mxu0 0.0
  %58 = vmatpush1.msra.mxu0 0.0
  %59 = vmatprep.subr.mxu0 0.0
  %60 = vmatpush1.msra.mxu0 0.0
  %61 = vmatprep.subr.mxu0 0.0
  %62 = vmatpush1.msra.mxu0 0.0
  %63 = vmatprep.subr.mxu0 0.0
  %64 = vmatpush1.msra.mxu0 0.0
  %65 = vmatprep.subr.mxu0 0.0
  %66 = vmatpush1.msra.mxu0 0.0
  %67 = vmatprep.subr.mxu0 0.0
  %68 = vmatpush1.msra.mxu0 0.0
  %69 = vmatprep.subr.mxu0 0.0
  %70 = vmatpush1.msra.mxu0 0.0
  %71 = vmatprep.subr.mxu0 0.0
  %72 = vmatpush1.msra.mxu0 0.0
  %73 = vmatprep.subr.mxu0 0.0
  %74 = vmatpush1.msra.mxu0 0.0
  %75 = vmatprep.subr.mxu0 0.0
  %76 = vmatpush1.msra.mxu0 0.0
  %77 = vmatprep.subr.mxu0 0.0
  %78 = vmatpush1.msra.mxu0 0.0
  %79 = vmatprep.subr.mxu0 0.0
  %80 = vmatpush1.msra.mxu0 0.0
  %81 = vmatprep.subr.mxu0 0.0
  %82 = vmatpush1.msra.mxu0 0.0
  %83 = vmatprep.subr.mxu0 0.0
  %84 = vmatpush1.msra.mxu0 0.0
  %85 = vmatprep.mubr.f32.mxu0 0.0
  %86 = vmatmul.mubr.f32.gmra.mrb[0].mxu0 %v15
  %v87 = vpop.f32.mrb[0].mxu0
  %v88 = vadd.f32 0.0, %v87
  %v89 = vpop.f32.mrb[0].mxu0
  %90 = vdwg.mxu0
  %vm91 = vcmask 392192
  %92 = vst.msk [vmem:[%s2] sm:$0xff] %vm91, %v88
  %s93 = scalar_lea.vmem %s1, 4
  %v94 = vld [vmem:[%s93] sm:$0xf]
  %v96 = vsel %vm17, %v94, 0
  %98 = vmatprep.subr.mxu0 0.0
  %99 = vmatpush1.msra.mxu0 %v96
  %100 = vmatprep.subr.mxu0 0.0
  %101 = vmatpush1.msra.mxu0 0.0
  %102 = vmatprep.subr.mxu0 0.0
  %103 = vmatpush1.msra.mxu0 0.0
  %104 = vmatprep.subr.mxu0 0.0
  %105 = vmatpush1.msra.mxu0 0.0
  %106 = vmatprep.subr.mxu0 0.0
  %107 = vmatpush1.msra.mxu0 0.0
  %108 = vmatprep.subr.mxu0 0.0
  %109 = vmatpush1.msra.mxu0 0.0
  %110 = vmatprep.subr.mxu0 0.0
  %111 = vmatpush1.msra.mxu0 0.0
  %112 = vmatprep.subr.mxu0 0.0
  %113 = vmatpush1.msra.mxu0 0.0
  %114 = vmatprep.subr.mxu0 0.0
  %115 = vmatpush1.msra.mxu0 0.0
  %116 = vmatprep.subr.mxu0 0.0
  %117 = vmatpush1.msra.mxu0 0.0
  %118 = vmatprep.subr.mxu0 0.0
  %119 = vmatpush1.msra.mxu0 0.0
  %120 = vmatprep.subr.mxu0 0.0
  %121 = vmatpush1.msra.mxu0 0.0
  %122 = vmatprep.subr.mxu0 0.0
  %123 = vmatpush1.msra.mxu0 0.0
  %124 = vmatprep.subr.mxu0 0.0
  %125 = vmatpush1.msra.mxu0 0.0
  %126 = vmatprep.subr.mxu0 0.0
  %127 = vmatpush1.msra.mxu0 0.0
  %128 = vmatprep.subr.mxu0 0.0
  %129 = vmatpush1.msra.mxu0 0.0
  %130 = vmatprep.subr.mxu0 0.0
  %131 = vmatpush1.msra.mxu0 0.0
  %132 = vmatprep.subr.mxu0 0.0
  %133 = vmatpush1.msra.mxu0 0.0
  %134 = vmatprep.subr.mxu0 0.0
  %135 = vmatpush1.msra.mxu0 0.0
  %136 = vmatprep.subr.mxu0 0.0
  %137 = vmatpush1.msra.mxu0 0.0
  %138 = vmatprep.subr.mxu0 0.0
  %139 = vmatpush1.msra.mxu0 0.0
  %140 = vmatprep.subr.mxu0 0.0
  %141 = vmatpush1.msra.mxu0 0.0
  %142 = vmatprep.subr.mxu0 0.0
  %143 = vmatpush1.msra.mxu0 0.0
  %144 = vmatprep.subr.mxu0 0.0
  %145 = vmatpush1.msra.mxu0 0.0
  %146 = vmatprep.subr.mxu0 0.0
  %147 = vmatpush1.msra.mxu0 0.0
  %148 = vmatprep.subr.mxu0 0.0
  %149 = vmatpush1.msra.mxu0 0.0
  %150 = vmatprep.subr.mxu0 0.0
  %151 = vmatpush1.msra.mxu0 0.0
  %152 = vmatprep.subr.mxu0 0.0
  %153 = vmatpush1.msra.mxu0 0.0
  %154 = vmatprep.subr.mxu0 0.0
  %155 = vmatpush1.msra.mxu0 0.0
  %156 = vmatprep.subr.mxu0 0.0
  %157 = vmatpush1.msra.mxu0 0.0
  %158 = vmatprep.subr.mxu0 0.0
  %159 = vmatpush1.msra.mxu0 0.0
  %160 = vmatprep.subr.mxu0 0.0
  %161 = vmatpush1.msra.mxu0 0.0
  %162 = vmatprep.mubr.f32.mxu0 0.0
  %163 = vmatmul.mubr.f32.gmra.mrb[0].mxu0 %v15
  %v164 = vpop.f32.mrb[0].mxu0
  %v165 = vadd.f32 0.0, %v164
  %v166 = vpop.f32.mrb[0].mxu0
  %167 = vdwg.mxu0
  %s168 = scalar_lea.vmem %s2, 8
  %169 = vst.msk [vmem:[%s168] sm:$0xff] %vm91, %v165
  // Predicated region
  $region10: #{vn_linear.1} parent=0 // pred_check
    _
  $region11: #{vn_linear.1} parent=0 // pred_check_branch
    %171 = sbr.rel (0) target = $region13
  $region12: #{vn_linear.1} parent=0 // pred_region
    _
  $region13: #{vn_linear.1} parent=0 // pred_fallthru
    _
  // Predicated region
  $region14: #{vn_linear.1} parent=0 // pred_check
    _
  $region15: #{vn_linear.1} parent=0 // pred_check_branch
    %173 = sbr.rel (0) target = $region17
  $region16: #{vn_linear.1} parent=0 // pred_region
    _
  $region17: #{vn_linear.1} parent=0 // pred_fallthru
    _

</llo_original>
